<compile_context>
chip_gen: v6e
topology: v6e:2x2x1
jax: 0.10.0
libtpu: 0.0.40
codegen_flags: <defaults>
</compile_context>

<pallas_src>
import functools

import jax
import jax.numpy as jnp
from jax.experimental import pallas as pl
from jax.experimental.pallas import tpu as pltpu


def conv_bn_relu6_kernel(x_ref, w_ref, b_ref, o_ref, col_ref, *,
                         KH, KW, Cp, Wp, Lwin):
    """One sub-batch (B_t stacked images) per grid step.

    x_ref:   (1, Cp, Lflat)      flat zero-padded stacked image (row stride Wp)
    w_ref:   (Cout, KH*KW*Cp)    BN-scale-folded conv weights (compute dtype)
    b_ref:   (Cout, 1)           folded BN bias (f32)
    o_ref:   (1, Cout, Lwin)     output slab, lane axis = B_t*Hp*Wp (dense)
    col_ref: (KH*KW*Cp, Lwin)    im2col scratch in VMEM
    """
    # Build the im2col matrix.  Tap (kh, kw) of the flattened padded image is a
    # single contiguous window shifted by kh*Wp + kw.  Each store covers a full,
    # sublane-aligned row group (Cp == sublane pack) over the full lane extent:
    # unmasked stores, no per-image or per-row loop.
    for kh in range(KH):
        for kw in range(KW):
            t = kh * KW + kw
            s = kh * Wp + kw
            col_ref[t * Cp:(t + 1) * Cp, :] = x_ref[0, :, s:s + Lwin]

    # Single MXU matmul (K = KH*KW*Cp) with f32 accumulation.
    # (If the bundle dump ever shows the col store/reload roundtrip as the
    # binding unit, switch to 9 accumulated dots on the shifted views instead.)
    y = jnp.dot(w_ref[...], col_ref[...], preferred_element_type=jnp.float32)
    y = y + b_ref[...]            # fused BatchNorm bias (scale already in weights)
    y = jnp.clip(y, 0.0, 6.0)     # ReLU6, f32 epilogue

    # One lane-dense store of the whole slab; junk columns stripped in wrapper.
    o_ref[0, :, :] = y.astype(o_ref.dtype)


def conv_bn_relu6(x_nchw, w_oihw, gamma, beta, running_mean, running_var, *,
                  eps=1e-5, compute_dtype=jnp.bfloat16, grid_batches=None):
    """Forward pass of ConvBNReLU (stride=1, groups=1, 'same' padding).

    x_nchw: (N, Cin, H, W) float32 (PyTorch layout)
    w_oihw: (Cout, Cin, KH, KW) float32 (PyTorch conv weight layout)
    compute_dtype: MXU feed dtype (bf16 default; accumulation is always f32)
    grid_batches:  number of grid steps (None -> 2 if batch is even else 1)
    Returns (N, Cout, H, W) float32.
    """
    N, Cin, H, W = x_nchw.shape
    Cout, Cin_w, KH, KW = w_oihw.shape
    assert Cin_w == Cin, "groups != 1 not supported here"
    assert KH == KW and KH % 2 == 1, "module uses odd square kernels"
    pad = (KH - 1) // 2
    Hp, Wp = H + 2 * pad, W + 2 * pad

    if grid_batches is None:
        grid_batches = 2 if (N % 2 == 0 and N >= 2) else 1
    assert N % grid_batches == 0, "batch must divide evenly into grid steps"
    G = grid_batches
    Bt = N // G                         # images folded per grid step

    # Sublane pack of the compute dtype: 8 rows for f32, 16 for bf16.
    pack = 8 * 4 // jnp.dtype(compute_dtype).itemsize
    Cp = -(-Cin // pack) * pack         # Cin rounded up to the sublane pack
    K = KH * KW * Cp

    # ---- fold BN (inference) into the conv: scale -> weights, bias separate ----
    scale = gamma / jnp.sqrt(running_var + eps)                      # (Cout,)
    bias = (beta - running_mean * scale).reshape(Cout, 1).astype(jnp.float32)
    w_scaled = (w_oihw * scale[:, None, None, None]).astype(jnp.float32)
    # Zero-pad the input-channel axis so padded w columns are exactly zero.
    w_padded = jnp.pad(w_scaled, ((0, 0), (0, Cp - Cin), (0, 0), (0, 0)))
    # Column order (kh, kw, ci) matches the im2col row order in the kernel.
    w_mat = jnp.transpose(w_padded, (0, 2, 3, 1)).reshape(Cout, K)
    w_mat = w_mat.astype(compute_dtype)

    # ---- build per-grid-step flat stacked images ----
    # Zero-pad channels (to Cp) and spatial ('same' pad), stack Bt images
    # vertically per grid tile, add a few extra zero rows so every shifted
    # window stays in bounds, then flatten with row stride Wp.
    x_p = jnp.pad(x_nchw, ((0, 0), (0, Cp - Cin), (pad, pad), (pad, pad)))
    x_t = x_p.reshape(G, Bt, Cp, Hp, Wp).transpose(0, 2, 1, 3, 4)    # (G,Cp,Bt,Hp,Wp)
    x_t = x_t.reshape(G, Cp, Bt * Hp, Wp)
    extra_rows = -(-((KH - 1) * Wp + (KW - 1)) // Wp)                 # ceil div
    x_t = jnp.pad(x_t, ((0, 0), (0, 0), (0, extra_rows), (0, 0)))
    Lflat = (Bt * Hp + extra_rows) * Wp
    x_flat = x_t.reshape(G, Cp, Lflat).astype(compute_dtype)

    Lwin = Bt * Hp * Wp                 # matmul / output lane dimension

    kernel = functools.partial(conv_bn_relu6_kernel,
                               KH=KH, KW=KW, Cp=Cp, Wp=Wp, Lwin=Lwin)

    out_flat = pl.pallas_call(
        kernel,
        out_shape=jax.ShapeDtypeStruct((G, Cout, Lwin), jnp.float32),
        grid_spec=pltpu.PrefetchScalarGridSpec(
            num_scalar_prefetch=0,
            grid=(G,),
            in_specs=[
                pl.BlockSpec((1, Cp, Lflat), lambda g: (g, 0, 0)),
                pl.BlockSpec((Cout, K), lambda g: (0, 0)),
                pl.BlockSpec((Cout, 1), lambda g: (0, 0)),
            ],
            out_specs=pl.BlockSpec((1, Cout, Lwin), lambda g: (g, 0, 0)),
            scratch_shapes=[pltpu.VMEM((K, Lwin), compute_dtype)],
        ),
        compiler_params=pltpu.CompilerParams(
            dimension_semantics=("parallel",)),
    )(x_flat, w_mat, bias)

    # (G, Cout, Bt*Hp*Wp) -> (N, Cout, H, W): reshape + cheap leading-dim
    # transpose (free when Bt == 1) + XLA slice to strip pad-junk rows/cols.
    out = out_flat.reshape(G, Cout, Bt, Hp, Wp).transpose(0, 2, 1, 3, 4)
    out = out.reshape(N, Cout, Hp, Wp)
    return out[:, :, :H, :W]


def _reference(x_nchw, w_oihw, gamma, beta, running_mean, running_var, eps=1e-5):
    pad = (w_oihw.shape[2] - 1) // 2
    y = jax.lax.conv_general_dilated(
        x_nchw, w_oihw, window_strides=(1, 1),
        padding=((pad, pad), (pad, pad)),
        dimension_numbers=("NCHW", "OIHW", "NCHW"))
    scale = (gamma / jnp.sqrt(running_var + eps)).reshape(1, -1, 1, 1)
    bias = (beta - running_mean * gamma / jnp.sqrt(running_var + eps)).reshape(1, -1, 1, 1)
    return jnp.clip(y * scale + bias, 0.0, 6.0)


if __name__ == "__main__":
    # Fixed "switch" width setting: in_channel=4, out_channel=8, kernel=3, stride=1.
    N, Cin, H, W = 2, 4, 16, 16
    Cout, KH, KW = 8, 3, 3

    key = jax.random.PRNGKey(0)
    k_x, k_w, k_g, k_b, k_m, k_v = jax.random.split(key, 6)

    x = jax.random.normal(k_x, (N, Cin, H, W), dtype=jnp.float32)
    w = jax.random.normal(k_w, (Cout, Cin, KH, KW), dtype=jnp.float32) * 0.2
    gamma = 1.0 + 0.1 * jax.random.normal(k_g, (Cout,), dtype=jnp.float32)
    beta = 0.1 * jax.random.normal(k_b, (Cout,), dtype=jnp.float32)
    running_mean = 0.1 * jax.random.normal(k_m, (Cout,), dtype=jnp.float32)
    running_var = jnp.abs(jax.random.normal(k_v, (Cout,), dtype=jnp.float32)) + 0.5

    ref = _reference(x, w, gamma, beta, running_mean, running_var)

    # Default path: bf16 MXU feed, f32 accumulation + f32 BN/ReLU6 epilogue.
    out = conv_bn_relu6(x, w, gamma, beta, running_mean, running_var)
    out = jax.block_until_ready(out)
    assert out.shape == (N, Cout, H, W)
    assert jnp.allclose(out, ref, atol=1e-1, rtol=1e-1)

    # f32 MXU feed: matches the f32 XLA reference tightly.
    out_f32 = conv_bn_relu6(x, w, gamma, beta, running_mean, running_var,
                            compute_dtype=jnp.float32)
    out_f32 = jax.block_until_ready(out_f32)
    assert out_f32.shape == (N, Cout, H, W)
    assert jnp.allclose(out_f32, ref, atol=1e-4, rtol=1e-4)

    # Single fat step (whole batch folded into one grid step) also works.
    out_one = conv_bn_relu6(x, w, gamma, beta, running_mean, running_var,
                            grid_batches=1)
    out_one = jax.block_until_ready(out_one)
    assert jnp.allclose(out_one, ref, atol=1e-1, rtol=1e-1)

    print("KERNEL_OK")
</pallas_src>

<mosaic_0001>
module attributes {stable_mosaic.version = 11 : i64} {
  func.func @conv_bn_relu6_kernel(%arg0: i32, %arg1: memref<1x16x378xbf16, #tpu.memory_space<vmem>>, %arg2: memref<8x144xbf16, #tpu.memory_space<vmem>>, %arg3: memref<8x1xf32, #tpu.memory_space<vmem>>, %arg4: memref<1x8x324xf32, #tpu.memory_space<vmem>>, %arg5: memref<144x324xbf16, #tpu.memory_space<vmem>>) attributes {dimension_semantics = [#tpu.dimension_semantics<parallel>], iteration_bounds = array<i64: 2>, scalar_prefetch = 0 : i64, scratch_operands = 1 : i64, tpu.core_type = #tpu.core_type<tc>, window_params = [{transform_indices = @transform_0, window_bounds = array<i64: 1, 16, 378>}, {pipeline_mode = #tpu.pipeline_mode<synchronous>, transform_indices = @transform_1, window_bounds = array<i64: 8, 144>}, {pipeline_mode = #tpu.pipeline_mode<synchronous>, transform_indices = @transform_2, window_bounds = array<i64: 8, 1>}, {transform_indices = @transform_3, window_bounds = array<i64: 1, 8, 324>}]} {
    %c0 = arith.constant 0 : index
    %c0_0 = arith.constant 0 : index
    %c0_1 = arith.constant 0 : index
    %0 = vector.load %arg1[%c0, %c0_0, %c0_1] : memref<1x16x378xbf16, #tpu.memory_space<vmem>>, vector<1x16x324xbf16>
    %1 = vector.shape_cast %0 : vector<1x16x324xbf16> to vector<16x324xbf16>
    %c0_2 = arith.constant 0 : index
    %c0_3 = arith.constant 0 : index
    %2 = vector.load %arg5[%c0_2, %c0_3] : memref<144x324xbf16, #tpu.memory_space<vmem>>, vector<16x324xbf16>
    tpu.vector_store %arg5[%c0_2, %c0_3], %1 {strides = array<i32>} : memref<144x324xbf16, #tpu.memory_space<vmem>>, vector<16x324xbf16>,
    %c0_4 = arith.constant 0 : index
    %c0_5 = arith.constant 0 : index
    %c1 = arith.constant 1 : index
    %3 = vector.load %arg1[%c0_4, %c0_5, %c1] : memref<1x16x378xbf16, #tpu.memory_space<vmem>>, vector<1x16x324xbf16>
    %4 = vector.shape_cast %3 : vector<1x16x324xbf16> to vector<16x324xbf16>
    %c16 = arith.constant 16 : index
    %c0_6 = arith.constant 0 : index
    %5 = vector.load %arg5[%c16, %c0_6] : memref<144x324xbf16, #tpu.memory_space<vmem>>, vector<16x324xbf16>
    tpu.vector_store %arg5[%c16, %c0_6], %4 {strides = array<i32>} : memref<144x324xbf16, #tpu.memory_space<vmem>>, vector<16x324xbf16>,
    %c0_7 = arith.constant 0 : index
    %c0_8 = arith.constant 0 : index
    %c2 = arith.constant 2 : index
    %6 = vector.load %arg1[%c0_7, %c0_8, %c2] : memref<1x16x378xbf16, #tpu.memory_space<vmem>>, vector<1x16x324xbf16>
    %7 = vector.shape_cast %6 : vector<1x16x324xbf16> to vector<16x324xbf16>
    %c32 = arith.constant 32 : index
    %c0_9 = arith.constant 0 : index
    %8 = vector.load %arg5[%c32, %c0_9] : memref<144x324xbf16, #tpu.memory_space<vmem>>, vector<16x324xbf16>
    tpu.vector_store %arg5[%c32, %c0_9], %7 {strides = array<i32>} : memref<144x324xbf16, #tpu.memory_space<vmem>>, vector<16x324xbf16>,
    %c0_10 = arith.constant 0 : index
    %c0_11 = arith.constant 0 : index
    %c18 = arith.constant 18 : index
    %9 = vector.load %arg1[%c0_10, %c0_11, %c18] : memref<1x16x378xbf16, #tpu.memory_space<vmem>>, vector<1x16x324xbf16>
    %10 = vector.shape_cast %9 : vector<1x16x324xbf16> to vector<16x324xbf16>
    %c48 = arith.constant 48 : index
    %c0_12 = arith.constant 0 : index
    %11 = vector.load %arg5[%c48, %c0_12] : memref<144x324xbf16, #tpu.memory_space<vmem>>, vector<16x324xbf16>
    tpu.vector_store %arg5[%c48, %c0_12], %10 {strides = array<i32>} : memref<144x324xbf16, #tpu.memory_space<vmem>>, vector<16x324xbf16>,
    %c0_13 = arith.constant 0 : index
    %c0_14 = arith.constant 0 : index
    %c19 = arith.constant 19 : index
    %12 = vector.load %arg1[%c0_13, %c0_14, %c19] : memref<1x16x378xbf16, #tpu.memory_space<vmem>>, vector<1x16x324xbf16>
    %13 = vector.shape_cast %12 : vector<1x16x324xbf16> to vector<16x324xbf16>
    %c64 = arith.constant 64 : index
    %c0_15 = arith.constant 0 : index
    %14 = vector.load %arg5[%c64, %c0_15] : memref<144x324xbf16, #tpu.memory_space<vmem>>, vector<16x324xbf16>
    tpu.vector_store %arg5[%c64, %c0_15], %13 {strides = array<i32>} : memref<144x324xbf16, #tpu.memory_space<vmem>>, vector<16x324xbf16>,
    %c0_16 = arith.constant 0 : index
    %c0_17 = arith.constant 0 : index
    %c20 = arith.constant 20 : index
    %15 = vector.load %arg1[%c0_16, %c0_17, %c20] : memref<1x16x378xbf16, #tpu.memory_space<vmem>>, vector<1x16x324xbf16>
    %16 = vector.shape_cast %15 : vector<1x16x324xbf16> to vector<16x324xbf16>
    %c80 = arith.constant 80 : index
    %c0_18 = arith.constant 0 : index
    %17 = vector.load %arg5[%c80, %c0_18] : memref<144x324xbf16, #tpu.memory_space<vmem>>, vector<16x324xbf16>
    tpu.vector_store %arg5[%c80, %c0_18], %16 {strides = array<i32>} : memref<144x324xbf16, #tpu.memory_space<vmem>>, vector<16x324xbf16>,
    %c0_19 = arith.constant 0 : index
    %c0_20 = arith.constant 0 : index
    %c36 = arith.constant 36 : index
    %18 = vector.load %arg1[%c0_19, %c0_20, %c36] : memref<1x16x378xbf16, #tpu.memory_space<vmem>>, vector<1x16x324xbf16>
    %19 = vector.shape_cast %18 : vector<1x16x324xbf16> to vector<16x324xbf16>
    %c96 = arith.constant 96 : index
    %c0_21 = arith.constant 0 : index
    %20 = vector.load %arg5[%c96, %c0_21] : memref<144x324xbf16, #tpu.memory_space<vmem>>, vector<16x324xbf16>
    tpu.vector_store %arg5[%c96, %c0_21], %19 {strides = array<i32>} : memref<144x324xbf16, #tpu.memory_space<vmem>>, vector<16x324xbf16>,
    %c0_22 = arith.constant 0 : index
    %c0_23 = arith.constant 0 : index
    %c37 = arith.constant 37 : index
    %21 = vector.load %arg1[%c0_22, %c0_23, %c37] : memref<1x16x378xbf16, #tpu.memory_space<vmem>>, vector<1x16x324xbf16>
    %22 = vector.shape_cast %21 : vector<1x16x324xbf16> to vector<16x324xbf16>
    %c112 = arith.constant 112 : index
    %c0_24 = arith.constant 0 : index
    %23 = vector.load %arg5[%c112, %c0_24] : memref<144x324xbf16, #tpu.memory_space<vmem>>, vector<16x324xbf16>
    tpu.vector_store %arg5[%c112, %c0_24], %22 {strides = array<i32>} : memref<144x324xbf16, #tpu.memory_space<vmem>>, vector<16x324xbf16>,
    %c0_25 = arith.constant 0 : index
    %c0_26 = arith.constant 0 : index
    %c38 = arith.constant 38 : index
    %24 = vector.load %arg1[%c0_25, %c0_26, %c38] : memref<1x16x378xbf16, #tpu.memory_space<vmem>>, vector<1x16x324xbf16>
    %25 = vector.shape_cast %24 : vector<1x16x324xbf16> to vector<16x324xbf16>
    %c128 = arith.constant 128 : index
    %c0_27 = arith.constant 0 : index
    %26 = vector.load %arg5[%c128, %c0_27] : memref<144x324xbf16, #tpu.memory_space<vmem>>, vector<16x324xbf16>
    tpu.vector_store %arg5[%c128, %c0_27], %25 {strides = array<i32>} : memref<144x324xbf16, #tpu.memory_space<vmem>>, vector<16x324xbf16>,
    %c0_28 = arith.constant 0 : index
    %c0_29 = arith.constant 0 : index
    %27 = vector.load %arg2[%c0_28, %c0_29] : memref<8x144xbf16, #tpu.memory_space<vmem>>, vector<8x144xbf16>
    %c0_30 = arith.constant 0 : index
    %c0_31 = arith.constant 0 : index
    %28 = vector.load %arg5[%c0_30, %c0_31] : memref<144x324xbf16, #tpu.memory_space<vmem>>, vector<144x324xbf16>
    %cst = arith.constant dense<0.000000e+00> : vector<8x324xf32>
    %29 = tpu.matmul %27, %28, %cst {dimension_numbers = #tpu.dot_dimension_numbers<[1], [0], [0], [1], [0, 0, 1, 1], [], []>} : vector<8x144xbf16>, vector<144x324xbf16>, vector<8x324xf32> -> vector<8x324xf32>
    %c0_32 = arith.constant 0 : index
    %c0_33 = arith.constant 0 : index
    %30 = vector.load %arg3[%c0_32, %c0_33] : memref<8x1xf32, #tpu.memory_space<vmem>>, vector<8x1xf32>
    %31 = vector.broadcast %30 : vector<8x1xf32> to vector<8x324xf32>
    %32 = arith.addf %29, %31 : vector<8x324xf32>
    %cst_34 = arith.constant 0.000000e+00 : f32
    %cst_35 = arith.constant 6.000000e+00 : f32
    %33 = vector.broadcast %cst_34 : f32 to vector<8x324xf32>
    %34 = arith.maximumf %33, %32 : vector<8x324xf32>
    %35 = vector.broadcast %cst_35 : f32 to vector<8x324xf32>
    %36 = arith.minimumf %35, %34 : vector<8x324xf32>
    %c0_36 = arith.constant 0 : index
    %c0_37 = arith.constant 0 : index
    %c0_38 = arith.constant 0 : index
    %37 = vector.load %arg4[%c0_36, %c0_37, %c0_38] : memref<1x8x324xf32, #tpu.memory_space<vmem>>, vector<1x8x324xf32>
    %38 = vector.shape_cast %37 : vector<1x8x324xf32> to vector<8x324xf32>
    %39 = vector.shape_cast %36 : vector<8x324xf32> to vector<1x8x324xf32>
    tpu.vector_store %arg4[%c0_36, %c0_37, %c0_38], %39 {strides = array<i32>} : memref<1x8x324xf32, #tpu.memory_space<vmem>>, vector<1x8x324xf32>,
    return
  }
  func.func @transform_0(%arg0: i32) -> (i32, i32, i32) {
    %c0_i32 = arith.constant 0 : i32
    %c0_i32_0 = arith.constant 0 : i32
    %c0_i32_1 = arith.constant 0 : i32
    return %arg0, %c0_i32, %c0_i32_0 : i32, i32, i32
  }
  func.func @transform_1(%arg0: i32) -> (i32, i32) {
    %c0_i32 = arith.constant 0 : i32
    %c0_i32_0 = arith.constant 0 : i32
    %c0_i32_1 = arith.constant 0 : i32
    return %c0_i32, %c0_i32_0 : i32, i32
  }
  func.func @transform_2(%arg0: i32) -> (i32, i32) {
    %c0_i32 = arith.constant 0 : i32
    %c0_i32_0 = arith.constant 0 : i32
    %c0_i32_1 = arith.constant 0 : i32
    return %c0_i32, %c0_i32_0 : i32, i32
  }
  func.func @transform_3(%arg0: i32) -> (i32, i32, i32) {
    %c0_i32 = arith.constant 0 : i32
    %c0_i32_0 = arith.constant 0 : i32
    %c0_i32_1 = arith.constant 0 : i32
    return %arg0, %c0_i32, %c0_i32_0 : i32, i32, i32
  }
}

</mosaic_0001>

<llo_original>
// kernel: tpu_custom_call.1
$region0: #{tpu_custom_call.1}
  #allocation0 [shape = 'u32[]', space=smem, size = 0x4, offset = 0x4, fixed_abs, tag = 'smem constant byte address 0x4 - core index']
  #allocation1 [shape = 'u32[144,128]{1,0:T(1,128)}', space=vmem, size = 0x12000, scoped, tag = 'internal scratch']
  #allocation2 [shape = 'bf16[144,324]{1,0:T(8,128)(2,1)}', space=vmem, size = 0x1b000, scoped, tag = 'scratch operand']
  %s0 = inlined_call_operand.hbm [shape: bf16[2,16,378], index: 0, kind: input, shape index: {}]
  %s1 = inlined_call_operand.vmem [shape: bf16[8,144], index: 1, kind: input, shape index: {}]
  %s2 = inlined_call_operand.vmem [shape: f32[8,1], index: 2, kind: input, shape index: {}]
  %s3 = inlined_call_operand.hbm [shape: f32[2,8,324], index: 3, kind: output, shape index: {}]
  %s4 = sld [smem:[#allocation0]]
  $region49: #{tpu_custom_call.1} parent=0
    _
  %s6 = ssub.s32 1, %s4
  %s7 = scalar_select 0, %s6, %s4
  $region1: #{tpu_custom_call.1} parent=0
    #allocation3 [shape = 'u8[24576]{0}', space=vmem, size = 0x6000, scoped, tag = 'input window, operand 0']
    #allocation4 [shape = 's32[2]{0}', space=sflag, size = 0x8, scoped, tag = 'scoped memory for tpu_custom_call.1']
    #allocation5 [shape = 's32[2]{0}', space=sflag, size = 0x8, scoped, tag = 'scoped memory for tpu_custom_call.1']
    #allocation6 [shape = 'u8[24576]{0}', space=vmem, size = 0x6000, scoped, tag = 'output window, operand 0']
    %8 = vsyncpa [#allocation4], 0
    %s9 = scalar_lea.sflag [#allocation4], 1
    %10 = vsyncpa %s9, 0
    %11 = vsyncpa [#allocation5], 0
    %s12 = scalar_lea.sflag [#allocation5], 1
    %13 = vsyncpa %s12, 0
    loop: start=0, step=1, limit=4
    $region2: #{tpu_custom_call.1} parent=1 // loop_pre_header
      _
    $region3: #{tpu_custom_call.1} parent=1 // loop_header
      %s15 = sphi 0, %s19
      %p16 = scmp.ge.s32.totalorder %s15, 4
      %s25 = sphi 0, %s27
      %s28 = sphi 0, %s25
      %s29 = sphi 0, %s28
      %s45 = sphi 0, %s29
      %s49 = sphi 0, %s49
      %s51 = sphi 0, %s49
      %s52 = sphi 0, %s51
      %s66 = sphi 0, %s52
      %s70 = sphi 0, %s70
      %s72 = sphi 0, %s70
      %s73 = sphi 0, %s72
      %s87 = sphi 0, %s73
      %s93 = sphi 0, %s95
      %s96 = sphi 0, %s93
      %s97 = sphi 0, %s96
      %s113 = sphi 0, %s97
    $region4: #{tpu_custom_call.1} parent=1 // loop_header_branch
      %18 = sbr.rel (%p16) target = $region8
    $region5: #{tpu_custom_call.1} parent=1 // loop_body
      %s20 = ssub.s32 %s15, 1
      %s21 = ssub.s32 %s15, 2
      %s22 = sadd.s32 %s15, 1
      %s23 = ssub.s32 %s15, %s22
      %p24 = scmp.eq.s32.totalorder %s23, 0
      %s26 = sadd.s32 %s25, 1
      %s27 = scalar_select %p24, %s25, %s26
      %p30 = pneg %p24
      %p31 = scmp.eq.s32.totalorder %s15, 1
      %p32 = por %p30, %p31
      %p33 = scmp.ne.s32.totalorder %s25, %s28
      %p34 = scmp.eq.s32.totalorder %s15, 0
      %p35 = por %p33, %p34
      %p36 = scmp.ne.s32.totalorder %s25, %s28
      %p37 = scmp.eq.s32.totalorder %s20, 1
      %p38 = por %p36, %p37
      %p39 = scmp.ne.s32.totalorder %s28, %s29
      %p40 = scmp.eq.s32.totalorder %s20, 0
      %p41 = por %p39, %p40
      %p42 = scmp.ne.s32.totalorder %s28, %s29
      %p43 = scmp.eq.s32.totalorder %s21, 1
      %p44 = por %p42, %p43
      %p46 = scmp.ne.s32.totalorder %s29, %s45
      %p47 = scmp.eq.s32.totalorder %s21, 0
      %p48 = por %p46, %p47
      %s50 = sadd.s32 %s49, 1
      %p53 = scmp.eq.s32.totalorder %s15, 1
      %p54 = scmp.ne.s32.totalorder %s49, %s51
      %p55 = scmp.eq.s32.totalorder %s15, 0
      %p56 = por %p54, %p55
      %p57 = scmp.ne.s32.totalorder %s49, %s51
      %p58 = scmp.eq.s32.totalorder %s20, 1
      %p59 = por %p57, %p58
      %p60 = scmp.ne.s32.totalorder %s51, %s52
      %p61 = scmp.eq.s32.totalorder %s20, 0
      %p62 = por %p60, %p61
      %p63 = scmp.ne.s32.totalorder %s51, %s52
      %p64 = scmp.eq.s32.totalorder %s21, 1
      %p65 = por %p63, %p64
      %p67 = scmp.ne.s32.totalorder %s52, %s66
      %p68 = scmp.eq.s32.totalorder %s21, 0
      %p69 = por %p67, %p68
      %s71 = sadd.s32 %s70, 1
      %p74 = scmp.eq.s32.totalorder %s15, 1
      %p75 = scmp.ne.s32.totalorder %s70, %s72
      %p76 = scmp.eq.s32.totalorder %s15, 0
      %p77 = por %p75, %p76
      %p78 = scmp.ne.s32.totalorder %s70, %s72
      %p79 = scmp.eq.s32.totalorder %s20, 1
      %p80 = por %p78, %p79
      %p81 = scmp.ne.s32.totalorder %s72, %s73
      %p82 = scmp.eq.s32.totalorder %s20, 0
      %p83 = por %p81, %p82
      %p84 = scmp.ne.s32.totalorder %s72, %s73
      %p85 = scmp.eq.s32.totalorder %s21, 1
      %p86 = por %p84, %p85
      %p88 = scmp.ne.s32.totalorder %s73, %s87
      %p89 = scmp.eq.s32.totalorder %s21, 0
      %p90 = por %p88, %p89
      %s91 = ssub.s32 %s15, %s22
      %p92 = scmp.eq.s32.totalorder %s91, 0
      %s94 = sadd.s32 %s93, 1
      %s95 = scalar_select %p92, %s93, %s94
      %p98 = pneg %p92
      %p99 = scmp.eq.s32.totalorder %s15, 1
      %p100 = por %p98, %p99
      %p101 = scmp.ne.s32.totalorder %s93, %s96
      %p102 = scmp.eq.s32.totalorder %s15, 0
      %p103 = por %p101, %p102
      %p104 = scmp.ne.s32.totalorder %s93, %s96
      %p105 = scmp.eq.s32.totalorder %s20, 1
      %p106 = por %p104, %p105
      %p107 = scmp.ne.s32.totalorder %s96, %s97
      %p108 = scmp.eq.s32.totalorder %s20, 0
      %p109 = por %p107, %p108
      %p110 = scmp.ne.s32.totalorder %s96, %s97
      %p111 = scmp.eq.s32.totalorder %s21, 1
      %p112 = por %p110, %p111
      %p114 = scmp.ne.s32.totalorder %s97, %s113
      %p115 = scmp.eq.s32.totalorder %s21, 0
      %p116 = por %p114, %p115
      %p117 = scmp.le.s32.totalorder 1, %s15
      %p118 = scmp.lt.s32.totalorder %s15, 3
      %p119 = pnand %p117, %p118
      %p120 = pneg %p119
      // Predicated region
      $region9: #{tpu_custom_call.1} parent=5 // pred_check
        _
      $region10: #{tpu_custom_call.1} parent=5 // pred_check_branch
        %122 = sbr.rel (%p119) target = $region12
      $region11: #{tpu_custom_call.1} parent=5 // pred_region
        %s123 = ssub.s32 %s15, 1
        // Predicated region
        $region13: #{tpu_custom_call.1} parent=11 // pred_check
          %p124 = pneg %p62
        $region14: #{tpu_custom_call.1} parent=11 // pred_check_branch
          %126 = sbr.rel (%p124) target = $region16
        $region15: #{tpu_custom_call.1} parent=11 // pred_region
          _
        $region16: #{tpu_custom_call.1} parent=11 // pred_fallthru
          _
        // Predicated region
        $region17: #{tpu_custom_call.1} parent=11 // pred_check
          %p127 = pneg %p83
        $region18: #{tpu_custom_call.1} parent=11 // pred_check_branch
          %129 = sbr.rel (%p127) target = $region20
        $region19: #{tpu_custom_call.1} parent=11 // pred_region
          _
        $region20: #{tpu_custom_call.1} parent=11 // pred_fallthru
          _
      $region12: #{tpu_custom_call.1} parent=5 // pred_fallthru
        _
      %p130 = scmp.lt.s32.totalorder %s15, 2
      // Predicated region
      $region21: #{tpu_custom_call.1} parent=5 // pred_check
        %p131 = pneg %p130
      $region22: #{tpu_custom_call.1} parent=5 // pred_check_branch
        %133 = sbr.rel (%p131) target = $region24
      $region23: #{tpu_custom_call.1} parent=5 // pred_region
        // Predicated region
        $region25: #{tpu_custom_call.1} parent=23 // pred_check
          %p134 = pneg %p35
        $region26: #{tpu_custom_call.1} parent=23 // pred_check_branch
          %136 = sbr.rel (%p134) target = $region28
        $region27: #{tpu_custom_call.1} parent=23 // pred_region
          %s137 = sand.u32 %s25, 1
          %s138 = scalar_lea.sflag [#allocation4], %s137
          %s139 = sand.u32 %s25, 1
          %s140 = smul.addr %s139, 24
          %s141 = scalar_lea.vmem [#allocation3], %s140
          %s143 = ssub.s32 384, 384
          %144 = vsyncadd %s138, %s143
          %s145 = smul.addr %s15, 6
          %s146 = smul.addr %s145, 64
          %s147 = scalar_lea.hbm %s0, %s146
          %s148 = sshll.u32 %s141, 4
          %s149 = int_to_ptr.vmem [resolvable:$true] %s148
          %154 = dma.hbm_to_vmem [thread:$0]  %s147, 384, %s149, %s138, 192, 192, 12
        $region28: #{tpu_custom_call.1} parent=23 // pred_fallthru
          _
      $region24: #{tpu_custom_call.1} parent=5 // pred_fallthru
        _
      %p155 = scmp.le.s32.totalorder 1, %s15
      %p156 = scmp.lt.s32.totalorder %s15, 3
      %p157 = pnand %p155, %p156
      %p158 = pneg %p157
      // Predicated region
      $region29: #{tpu_custom_call.1} parent=5 // pred_check
        _
      $region30: #{tpu_custom_call.1} parent=5 // pred_check_branch
        %160 = sbr.rel (%p157) target = $region32
      $region31: #{tpu_custom_call.1} parent=5 // pred_region
        %s161 = ssub.s32 %s15, 1
        %s162 = sand.u32 %s28, 1
        %s163 = scalar_lea.sflag [#allocation4], %s162
        %s164 = sand.u32 %s28, 1
        %s165 = smul.addr %s164, 24
        %s166 = scalar_lea.vmem [#allocation3], %s165
        // Predicated region
        $region33: #{tpu_custom_call.1} parent=31 // pred_check
          %p167 = pneg %p41
        $region34: #{tpu_custom_call.1} parent=31 // pred_check_branch
          %169 = sbr.rel (%p167) target = $region36
        $region35: #{tpu_custom_call.1} parent=31 // pred_region
          %170 = dma.done %s163, 384
        $region36: #{tpu_custom_call.1} parent=31 // pred_fallthru
          _
        %s171 = sand.u32 %s28, 1
        %s172 = scalar_lea.sflag [#allocation4], %s171
        %s173 = sand.u32 %s28, 1
        %s174 = smul.addr %s173, 24
        %s175 = scalar_lea.vmem [#allocation3], %s174
        %p176 = pneg %p41
        %p177 = pneg %p38
        %p178 = pneg %p62
        %p179 = pneg %p59
        %p180 = pneg %p83
        %p181 = pneg %p80
        %p182 = pneg %p109
        %p183 = pneg %p106
        %s184 = sand.u32 %s96, 1
        %s185 = scalar_lea.sflag [#allocation5], %s184
        %s186 = sand.u32 %s96, 1
        %s187 = smul.addr %s186, 24
        %s188 = scalar_lea.vmem [#allocation6], %s187
        %v190 = vld [vmem:[%s166] sm:$0xff]
        %v191 = vld [vmem:[%s166 + $0x8] sm:$0xf]
        %v192 = vld [vmem:[%s166 + $0xc] sm:$0xff]
        %v193 = vld [vmem:[%s166 + $0x14] sm:$0xf]
        %194 = vst [vmem:[#allocation2] sm:$0xff] %v190
        %vm195 = vcmask 551936
        %196 = vst.msk [vmem:[#allocation2 + $0x8] sm:$0xf] %vm195, %v191
        %197 = vst [vmem:[#allocation2 + $0xc] sm:$0xff] %v192
        %198 = vst.msk [vmem:[#allocation2 + $0x14] sm:$0xf] %vm195, %v193
        %v199 = vld [vmem:[%s166] sm:$0xff]
        %v200 = vld [vmem:[%s166 + $0x8] sm:$0xf]
        %v201 = vld [vmem:[%s166 + $0xc] sm:$0xff]
        %v202 = vld [vmem:[%s166 + $0x14] sm:$0xf]
        %207 = vrot.lane.b32.xlu0 %v199, 127
        %v208 = vpop.permute.xlu0 %207
        %209 = vrot.lane.b32.xlu0 %v200, 127
        %v210 = vpop.permute.xlu0 %209
        %211 = vrot.lane.b32.xlu0 %v201, 127
        %v212 = vpop.permute.xlu0 %211
        %213 = vrot.lane.b32.xlu0 %v202, 127
        %v214 = vpop.permute.xlu0 %213
        %v215 = vrot.slane %v208, 4
        %v216 = vrot.slane %v210, 4
        %v217 = vrot.slane %v212, 4
        %v218 = vrot.slane %v214, 4
        %vm219 = vcmask 1043456
        %v220 = vsel %vm219, %v215, %v216
        %vm221 = vcmask 1039360
        %v222 = vsel %vm221, %v208, %v220
        %v223 = vsel %vm219, %v217, %v218
        %v224 = vsel %vm221, %v212, %v223
        %229 = vst [vmem:[#allocation2 + $0x18] sm:$0xff] %v222
        %230 = vst.msk [vmem:[#allocation2 + $0x20] sm:$0xf] %vm195, %v210
        %231 = vst [vmem:[#allocation2 + $0x24] sm:$0xff] %v224
        %232 = vst.msk [vmem:[#allocation2 + $0x2c] sm:$0xf] %vm195, %v214
        %v233 = vld [vmem:[%s166] sm:$0xff]
        %v234 = vld [vmem:[%s166 + $0x8] sm:$0xf]
        %v235 = vld [vmem:[%s166 + $0xc] sm:$0xff]
        %v236 = vld [vmem:[%s166 + $0x14] sm:$0xf]
        %241 = vrot.lane.b32.xlu0 %v233, 126
        %v242 = vpop.permute.xlu0 %241
        %243 = vrot.lane.b32.xlu0 %v234, 126
        %v244 = vpop.permute.xlu0 %243
        %245 = vrot.lane.b32.xlu0 %v235, 126
        %v246 = vpop.permute.xlu0 %245
        %247 = vrot.lane.b32.xlu0 %v236, 126
        %v248 = vpop.permute.xlu0 %247
        %v249 = vrot.slane %v242, 4
        %v250 = vrot.slane %v244, 4
        %v251 = vrot.slane %v246, 4
        %v252 = vrot.slane %v248, 4
        %v253 = vsel %vm219, %v249, %v250
        %vm254 = vcmask 1031168
        %v255 = vsel %vm254, %v242, %v253
        %v256 = vsel %vm219, %v251, %v252
        %v257 = vsel %vm254, %v246, %v256
        %262 = vst [vmem:[#allocation2 + $0x30] sm:$0xff] %v255
        %263 = vst.msk [vmem:[#allocation2 + $0x38] sm:$0xf] %vm195, %v244
        %264 = vst [vmem:[#allocation2 + $0x3c] sm:$0xff] %v257
        %265 = vst.msk [vmem:[#allocation2 + $0x44] sm:$0xf] %vm195, %v248
        %v266 = vld [vmem:[%s166] sm:$0xff]
        %v267 = vld [vmem:[%s166 + $0x8] sm:$0xf]
        %v268 = vld [vmem:[%s166 + $0xc] sm:$0xff]
        %v269 = vld [vmem:[%s166 + $0x14] sm:$0xf]
        %274 = vrot.lane.b32.xlu0 %v266, 110
        %v275 = vpop.permute.xlu0 %274
        %276 = vrot.lane.b32.xlu0 %v267, 110
        %v277 = vpop.permute.xlu0 %276
        %278 = vrot.lane.b32.xlu0 %v268, 110
        %v279 = vpop.permute.xlu0 %278
        %280 = vrot.lane.b32.xlu0 %v269, 110
        %v281 = vpop.permute.xlu0 %280
        %v282 = vrot.slane %v275, 4
        %v283 = vrot.slane %v277, 4
        %v284 = vrot.slane %v279, 4
        %v285 = vrot.slane %v281, 4
        %v286 = vsel %vm219, %v282, %v283
        %vm287 = vcmask 900096
        %v288 = vsel %vm287, %v275, %v286
        %v289 = vsel %vm219, %v284, %v285
        %v290 = vsel %vm287, %v279, %v289
        %295 = vst [vmem:[#allocation2 + $0x48] sm:$0xff] %v288
        %296 = vst.msk [vmem:[#allocation2 + $0x50] sm:$0xf] %vm195, %v277
        %297 = vst [vmem:[#allocation2 + $0x54] sm:$0xff] %v290
        %298 = vst.msk [vmem:[#allocation2 + $0x5c] sm:$0xf] %vm195, %v281
        %v299 = vld [vmem:[%s166] sm:$0xff]
        %v300 = vld [vmem:[%s166 + $0x8] sm:$0xf]
        %v301 = vld [vmem:[%s166 + $0xc] sm:$0xff]
        %v302 = vld [vmem:[%s166 + $0x14] sm:$0xf]
        %307 = vrot.lane.b32.xlu0 %v299, 109
        %v308 = vpop.permute.xlu0 %307
        %309 = vrot.lane.b32.xlu0 %v300, 109
        %v310 = vpop.permute.xlu0 %309
        %311 = vrot.lane.b32.xlu0 %v301, 109
        %v312 = vpop.permute.xlu0 %311
        %313 = vrot.lane.b32.xlu0 %v302, 109
        %v314 = vpop.permute.xlu0 %313
        %v315 = vrot.slane %v308, 4
        %v316 = vrot.slane %v310, 4
        %v317 = vrot.slane %v312, 4
        %v318 = vrot.slane %v314, 4
        %v319 = vsel %vm219, %v315, %v316
        %vm320 = vcmask 891904
        %v321 = vsel %vm320, %v308, %v319
        %v322 = vsel %vm219, %v317, %v318
        %v323 = vsel %vm320, %v312, %v322
        %328 = vst [vmem:[#allocation2 + $0x60] sm:$0xff] %v321
        %329 = vst.msk [vmem:[#allocation2 + $0x68] sm:$0xf] %vm195, %v310
        %330 = vst [vmem:[#allocation2 + $0x6c] sm:$0xff] %v323
        %331 = vst.msk [vmem:[#allocation2 + $0x74] sm:$0xf] %vm195, %v314
        %v332 = vld [vmem:[%s166] sm:$0xff]
        %v333 = vld [vmem:[%s166 + $0x8] sm:$0xf]
        %v334 = vld [vmem:[%s166 + $0xc] sm:$0xff]
        %v335 = vld [vmem:[%s166 + $0x14] sm:$0xf]
        %340 = vrot.lane.b32.xlu0 %v332, 108
        %v341 = vpop.permute.xlu0 %340
        %342 = vrot.lane.b32.xlu0 %v333, 108
        %v343 = vpop.permute.xlu0 %342
        %344 = vrot.lane.b32.xlu0 %v334, 108
        %v345 = vpop.permute.xlu0 %344
        %346 = vrot.lane.b32.xlu0 %v335, 108
        %v347 = vpop.permute.xlu0 %346
        %v348 = vrot.slane %v341, 4
        %v349 = vrot.slane %v343, 4
        %v350 = vrot.slane %v345, 4
        %v351 = vrot.slane %v347, 4
        %v352 = vsel %vm219, %v348, %v349
        %vm353 = vcmask 883712
        %v354 = vsel %vm353, %v341, %v352
        %v355 = vsel %vm219, %v350, %v351
        %v356 = vsel %vm353, %v345, %v355
        %361 = vst [vmem:[#allocation2 + $0x78] sm:$0xff] %v354
        %362 = vst.msk [vmem:[#allocation2 + $0x80] sm:$0xf] %vm195, %v343
        %363 = vst [vmem:[#allocation2 + $0x84] sm:$0xff] %v356
        %364 = vst.msk [vmem:[#allocation2 + $0x8c] sm:$0xf] %vm195, %v347
        %v365 = vld [vmem:[%s166] sm:$0xff]
        %v366 = vld [vmem:[%s166 + $0x8] sm:$0xf]
        %v367 = vld [vmem:[%s166 + $0xc] sm:$0xff]
        %v368 = vld [vmem:[%s166 + $0x14] sm:$0xf]
        %373 = vrot.lane.b32.xlu0 %v365, 92
        %v374 = vpop.permute.xlu0 %373
        %375 = vrot.lane.b32.xlu0 %v366, 92
        %v376 = vpop.permute.xlu0 %375
        %377 = vrot.lane.b32.xlu0 %v367, 92
        %v378 = vpop.permute.xlu0 %377
        %379 = vrot.lane.b32.xlu0 %v368, 92
        %v380 = vpop.permute.xlu0 %379
        %v381 = vrot.slane %v374, 4
        %v382 = vrot.slane %v376, 4
        %v383 = vrot.slane %v378, 4
        %v384 = vrot.slane %v380, 4
        %v385 = vsel %vm219, %v381, %v382
        %vm386 = vcmask 752640
        %v387 = vsel %vm386, %v374, %v385
        %v388 = vsel %vm219, %v383, %v384
        %v389 = vsel %vm386, %v378, %v388
        %394 = vst [vmem:[#allocation2 + $0x90] sm:$0xff] %v387
        %395 = vst.msk [vmem:[#allocation2 + $0x98] sm:$0xf] %vm195, %v376
        %396 = vst [vmem:[#allocation2 + $0x9c] sm:$0xff] %v389
        %397 = vst.msk [vmem:[#allocation2 + $0xa4] sm:$0xf] %vm195, %v380
        %v398 = vld [vmem:[%s166] sm:$0xff]
        %v399 = vld [vmem:[%s166 + $0x8] sm:$0xf]
        %v400 = vld [vmem:[%s166 + $0xc] sm:$0xff]
        %v401 = vld [vmem:[%s166 + $0x14] sm:$0xf]
        %406 = vrot.lane.b32.xlu0 %v398, 91
        %v407 = vpop.permute.xlu0 %406
        %408 = vrot.lane.b32.xlu0 %v399, 91
        %v409 = vpop.permute.xlu0 %408
        %410 = vrot.lane.b32.xlu0 %v400, 91
        %v411 = vpop.permute.xlu0 %410
        %412 = vrot.lane.b32.xlu0 %v401, 91
        %v413 = vpop.permute.xlu0 %412
        %v414 = vrot.slane %v407, 4
        %v415 = vrot.slane %v409, 4
        %v416 = vrot.slane %v411, 4
        %v417 = vrot.slane %v413, 4
        %v418 = vsel %vm219, %v414, %v415
        %vm419 = vcmask 744448
        %v420 = vsel %vm419, %v407, %v418
        %v421 = vsel %vm219, %v416, %v417
        %v422 = vsel %vm419, %v411, %v421
        %427 = vst [vmem:[#allocation2 + $0xa8] sm:$0xff] %v420
        %428 = vst.msk [vmem:[#allocation2 + $0xb0] sm:$0xf] %vm195, %v409
        %429 = vst [vmem:[#allocation2 + $0xb4] sm:$0xff] %v422
        %430 = vst.msk [vmem:[#allocation2 + $0xbc] sm:$0xf] %vm195, %v413
        %v431 = vld [vmem:[%s166] sm:$0xff]
        %v432 = vld [vmem:[%s166 + $0x8] sm:$0xf]
        %v433 = vld [vmem:[%s166 + $0xc] sm:$0xff]
        %v434 = vld [vmem:[%s166 + $0x14] sm:$0xf]
        %439 = vrot.lane.b32.xlu0 %v431, 90
        %v440 = vpop.permute.xlu0 %439
        %441 = vrot.lane.b32.xlu0 %v432, 90
        %v442 = vpop.permute.xlu0 %441
        %443 = vrot.lane.b32.xlu0 %v433, 90
        %v444 = vpop.permute.xlu0 %443
        %445 = vrot.lane.b32.xlu0 %v434, 90
        %v446 = vpop.permute.xlu0 %445
        %v447 = vrot.slane %v440, 4
        %v448 = vrot.slane %v442, 4
        %v449 = vrot.slane %v444, 4
        %v450 = vrot.slane %v446, 4
        %v451 = vsel %vm219, %v447, %v448
        %vm452 = vcmask 736256
        %v453 = vsel %vm452, %v440, %v451
        %v454 = vsel %vm219, %v449, %v450
        %v455 = vsel %vm452, %v444, %v454
        %460 = vst [vmem:[#allocation2 + $0xc0] sm:$0xff] %v453
        %461 = vst.msk [vmem:[#allocation2 + $0xc8] sm:$0xf] %vm195, %v442
        %462 = vst [vmem:[#allocation2 + $0xcc] sm:$0xff] %v455
        %463 = vst.msk [vmem:[#allocation2 + $0xd4] sm:$0xf] %vm195, %v446
        %v464 = vld [vmem:[%s1] sm:$0xff]
        %v465 = vld [vmem:[#allocation2] sm:$0xff]
        %v466 = vld [vmem:[#allocation2 + $0x8] sm:$0xf]
        %v467 = vld [vmem:[#allocation2 + $0xc] sm:$0xff]
        %v468 = vld [vmem:[#allocation2 + $0x14] sm:$0xf]
        %v469 = vld [vmem:[#allocation2 + $0x18] sm:$0xff]
        %v470 = vld [vmem:[#allocation2 + $0x20] sm:$0xf]
        %v471 = vld [vmem:[#allocation2 + $0x24] sm:$0xff]
        %v472 = vld [vmem:[#allocation2 + $0x2c] sm:$0xf]
        %v473 = vld [vmem:[#allocation2 + $0x30] sm:$0xff]
        %v474 = vld [vmem:[#allocation2 + $0x38] sm:$0xf]
        %v475 = vld [vmem:[#allocation2 + $0x3c] sm:$0xff]
        %v476 = vld [vmem:[#allocation2 + $0x44] sm:$0xf]
        %v477 = vld [vmem:[#allocation2 + $0x48] sm:$0xff]
        %v478 = vld [vmem:[#allocation2 + $0x50] sm:$0xf]
        %v479 = vld [vmem:[#allocation2 + $0x54] sm:$0xff]
        %v480 = vld [vmem:[#allocation2 + $0x5c] sm:$0xf]
        %v481 = vld [vmem:[#allocation2 + $0x60] sm:$0xff]
        %v482 = vld [vmem:[#allocation2 + $0x68] sm:$0xf]
        %v483 = vld [vmem:[#allocation2 + $0x6c] sm:$0xff]
        %v484 = vld [vmem:[#allocation2 + $0x74] sm:$0xf]
        %v485 = vld [vmem:[#allocation2 + $0x78] sm:$0xff]
        %v486 = vld [vmem:[#allocation2 + $0x80] sm:$0xf]
        %v487 = vld [vmem:[#allocation2 + $0x84] sm:$0xff]
        %v488 = vld [vmem:[#allocation2 + $0x8c] sm:$0xf]
        %v489 = vld [vmem:[#allocation2 + $0x90] sm:$0xff]
        %v490 = vld [vmem:[#allocation2 + $0x98] sm:$0xf]
        %v491 = vld [vmem:[#allocation2 + $0x9c] sm:$0xff]
        %v492 = vld [vmem:[#allocation2 + $0xa4] sm:$0xf]
        %v493 = vld [vmem:[#allocation2 + $0xa8] sm:$0xff]
        %v494 = vld [vmem:[#allocation2 + $0xb0] sm:$0xf]
        %v495 = vld [vmem:[#allocation2 + $0xb4] sm:$0xff]
        %v496 = vld [vmem:[#allocation2 + $0xbc] sm:$0xf]
        %v497 = vld [vmem:[#allocation2 + $0xc0] sm:$0xff]
        %v498 = vld [vmem:[#allocation2 + $0xc8] sm:$0xf]
        %v499 = vld [vmem:[#allocation2 + $0xcc] sm:$0xff]
        %v500 = vld [vmem:[#allocation2 + $0xd4] sm:$0xf]
        %v501 = vld [vmem:[%s2] sm:$0xff]
        %503 = vset.pattern.permute.xlu0 0
        %504 = vperm.xlu0 %503, %v501
        %v505 = vpop.permute.xlu0 %504
        %v508 = vunpack.c.l.b16 %v464
        %v509 = vunpack.c.h.b16 %v464
        %v510 = vpack.c.b16 %v508, %v508
        %v511 = vpack.c.b16 %v509, %v509
        %v549 = vunpack.c.l.b16 %v465
        %v550 = vunpack.c.h.b16 %v465
        %v551 = vunpack.c.l.b16 %v466
        %v552 = vunpack.c.l.b16 %v467
        %v553 = vunpack.c.h.b16 %v467
        %v554 = vunpack.c.l.b16 %v468
        %v555 = vunpack.c.l.b16 %v469
        %v556 = vunpack.c.h.b16 %v469
        %v557 = vunpack.c.l.b16 %v470
        %v558 = vunpack.c.l.b16 %v471
        %v559 = vunpack.c.h.b16 %v471
        %v560 = vunpack.c.l.b16 %v472
        %v561 = vunpack.c.l.b16 %v473
        %v562 = vunpack.c.h.b16 %v473
        %v563 = vunpack.c.l.b16 %v474
        %v564 = vunpack.c.l.b16 %v475
        %v565 = vunpack.c.h.b16 %v475
        %v566 = vunpack.c.l.b16 %v476
        %v567 = vunpack.c.l.b16 %v477
        %v568 = vunpack.c.h.b16 %v477
        %v569 = vunpack.c.l.b16 %v478
        %v570 = vunpack.c.l.b16 %v479
        %v571 = vunpack.c.h.b16 %v479
        %v572 = vunpack.c.l.b16 %v480
        %v573 = vunpack.c.l.b16 %v481
        %v574 = vunpack.c.h.b16 %v481
        %v575 = vunpack.c.l.b16 %v482
        %v576 = vunpack.c.l.b16 %v483
        %v577 = vunpack.c.h.b16 %v483
        %v578 = vunpack.c.l.b16 %v484
        %v579 = vunpack.c.l.b16 %v485
        %v580 = vunpack.c.h.b16 %v485
        %v581 = vunpack.c.l.b16 %v486
        %v582 = vunpack.c.l.b16 %v487
        %v583 = vunpack.c.h.b16 %v487
        %v584 = vunpack.c.l.b16 %v488
        %v585 = vunpack.c.l.b16 %v489
        %v586 = vunpack.c.h.b16 %v489
        %v587 = vunpack.c.l.b16 %v490
        %v588 = vunpack.c.l.b16 %v491
        %v589 = vunpack.c.h.b16 %v491
        %v590 = vunpack.c.l.b16 %v492
        %v591 = vunpack.c.l.b16 %v493
        %v592 = vunpack.c.h.b16 %v493
        %v593 = vunpack.c.l.b16 %v494
        %v594 = vunpack.c.l.b16 %v495
        %v595 = vunpack.c.h.b16 %v495
        %v596 = vunpack.c.l.b16 %v496
        %v597 = vunpack.c.l.b16 %v497
        %v598 = vunpack.c.h.b16 %v497
        %v599 = vunpack.c.l.b16 %v498
        %v600 = vunpack.c.l.b16 %v499
        %v601 = vunpack.c.h.b16 %v499
        %v602 = vunpack.c.l.b16 %v500
        %v603 = vpack.c.b16 %v552, %v549
        %v604 = vpack.c.b16 %v553, %v550
        %v605 = vpack.c.b16 %v554, %v551
        %v606 = vpack.c.b16 %v558, %v555
        %v607 = vpack.c.b16 %v559, %v556
        %v608 = vpack.c.b16 %v560, %v557
        %v609 = vpack.c.b16 %v564, %v561
        %v610 = vpack.c.b16 %v565, %v562
        %v611 = vpack.c.b16 %v566, %v563
        %v612 = vpack.c.b16 %v570, %v567
        %v613 = vpack.c.b16 %v571, %v568
        %v614 = vpack.c.b16 %v572, %v569
        %v615 = vpack.c.b16 %v576, %v573
        %v616 = vpack.c.b16 %v577, %v574
        %v617 = vpack.c.b16 %v578, %v575
        %v618 = vpack.c.b16 %v582, %v579
        %v619 = vpack.c.b16 %v583, %v580
        %v620 = vpack.c.b16 %v584, %v581
        %v621 = vpack.c.b16 %v588, %v585
        %v622 = vpack.c.b16 %v589, %v586
        %v623 = vpack.c.b16 %v590, %v587
        %v624 = vpack.c.b16 %v594, %v591
        %v625 = vpack.c.b16 %v595, %v592
        %v626 = vpack.c.b16 %v596, %v593
        %v627 = vpack.c.b16 %v600, %v597
        %v628 = vpack.c.b16 %v601, %v598
        %v629 = vpack.c.b16 %v602, %v599
        %vm657 = vcmask 130048
        %v659 = vsel %vm657, %v511, 0
        %661 = vmatprep.subr.bf16.mxu0 %v625
        %662 = vmatpush1.bf16.msra.mxu0 %v624
        %663 = vmatprep.subr.bf16.mxu0 %v622
        %664 = vmatpush1.bf16.msra.mxu0 %v621
        %665 = vmatprep.subr.bf16.mxu0 %v619
        %666 = vmatpush1.bf16.msra.mxu0 %v618
        %667 = vmatprep.subr.bf16.mxu0 %v616
        %668 = vmatpush1.bf16.msra.mxu0 %v615
        %669 = vmatprep.subr.bf16.mxu0 %v613
        %670 = vmatpush1.bf16.msra.mxu0 %v612
        %671 = vmatprep.subr.bf16.mxu0 %v610
        %672 = vmatpush1.bf16.msra.mxu0 %v609
        %673 = vmatprep.subr.bf16.mxu0 %v607
        %674 = vmatpush1.bf16.msra.mxu0 %v606
        %675 = vmatprep.subr.bf16.mxu0 %v604
        %676 = vmatpush1.bf16.msra.mxu0 %v603
        %677 = vmatprep.subr.bf16.mxu0 0
        %678 = vmatpush2.bf16.msra.mxu0 0
        %679 = vmatprep.subr.bf16.mxu0 0
        %680 = vmatpush2.bf16.msra.mxu0 0
        %681 = vmatprep.subr.bf16.mxu0 0
        %682 = vmatpush2.bf16.msra.mxu0 0
        %683 = vmatprep.subr.bf16.mxu0 0
        %684 = vmatpush2.bf16.msra.mxu0 0
        %685 = vmatprep.subr.bf16.mxu0 0
        %686 = vmatpush2.bf16.msra.mxu0 0
        %687 = vmatprep.subr.bf16.mxu0 0
        %688 = vmatpush2.bf16.msra.mxu0 0
        %689 = vmatprep.subr.bf16.mxu0 0
        %690 = vmatpush2.bf16.msra.mxu0 0
        %691 = vmatprep.subr.bf16.mxu0 %v628
        %692 = vmatpush2.bf16.msra.mxu0 %v627
        %693 = vmatprep.mubr.bf16.mxu0 %v659
        %694 = vmatmul.mubr.bf16.gmra.mxu0 %v510
        %v695 = vpop.f32.mrf.mxu0
        %v696 = vadd.f32 %v505, %v695
        %v697 = vpop.f32.mrf.mxu0
        %v698 = vadd.f32 %v505, %v697
        %v699 = vpop.f32.mrf.mxu0
        %v700 = vpop.f32.mrf.mxu0
        %701 = vdwg.mxu0
        %702 = vmatprep.subr.bf16.mxu0 0
        %703 = vmatpush1.bf16.msra.mxu0 %v626
        %704 = vmatprep.subr.bf16.mxu0 0
        %705 = vmatpush1.bf16.msra.mxu0 %v623
        %706 = vmatprep.subr.bf16.mxu0 0
        %707 = vmatpush1.bf16.msra.mxu0 %v620
        %708 = vmatprep.subr.bf16.mxu0 0
        %709 = vmatpush1.bf16.msra.mxu0 %v617
        %710 = vmatprep.subr.bf16.mxu0 0
        %711 = vmatpush1.bf16.msra.mxu0 %v614
        %712 = vmatprep.subr.bf16.mxu0 0
        %713 = vmatpush1.bf16.msra.mxu0 %v611
        %714 = vmatprep.subr.bf16.mxu0 0
        %715 = vmatpush1.bf16.msra.mxu0 %v608
        %716 = vmatprep.subr.bf16.mxu0 0
        %717 = vmatpush1.bf16.msra.mxu0 %v605
        %718 = vmatprep.subr.bf16.mxu0 0
        %719 = vmatpush2.bf16.msra.mxu0 0
        %720 = vmatprep.subr.bf16.mxu0 0
        %721 = vmatpush2.bf16.msra.mxu0 0
        %722 = vmatprep.subr.bf16.mxu0 0
        %723 = vmatpush2.bf16.msra.mxu0 0
        %724 = vmatprep.subr.bf16.mxu0 0
        %725 = vmatpush2.bf16.msra.mxu0 0
        %726 = vmatprep.subr.bf16.mxu0 0
        %727 = vmatpush2.bf16.msra.mxu0 0
        %728 = vmatprep.subr.bf16.mxu0 0
        %729 = vmatpush2.bf16.msra.mxu0 0
        %730 = vmatprep.subr.bf16.mxu0 0
        %731 = vmatpush2.bf16.msra.mxu0 0
        %732 = vmatprep.subr.bf16.mxu0 0
        %733 = vmatpush2.bf16.msra.mxu0 %v629
        %734 = vmatprep.mubr.bf16.mxu0 %v659
        %735 = vmatmul.mubr.bf16.gmra.mxu0 %v510
        %v736 = vpop.f32.mrf.mxu0
        %v737 = vadd.f32 %v505, %v736
        %v738 = vpop.f32.mrf.mxu0
        %v739 = vpop.f32.mrf.mxu0
        %v740 = vpop.f32.mrf.mxu0
        %741 = vdwg.mxu0
        %v742 = vmax.f32 %v696, 0.0
        %v743 = vmax.f32 %v698, 0.0
        %v744 = vmax.f32 %v737, 0.0
        %v745 = vmin.f32 %v742, 6.0
        %v746 = vmin.f32 %v743, 6.0
        %v747 = vmin.f32 %v744, 6.0
        %748 = vst [vmem:[%s188] sm:$0xff] %v745
        %749 = vst [vmem:[%s188 + $0x8] sm:$0xff] %v746
        %vm750 = vcmask 556032
        %751 = vst.msk [vmem:[%s188 + $0x10] sm:$0xff] %vm750, %v747
        %s752 = sand.u32 %s96, 1
        %s753 = scalar_lea.sflag [#allocation5], %s752
        %s754 = sand.u32 %s96, 1
        %s755 = smul.addr %s754, 24
        %s756 = scalar_lea.vmem [#allocation6], %s755
        // Predicated region
        $region37: #{tpu_custom_call.1} parent=31 // pred_check
          %p757 = pneg %p106
        $region38: #{tpu_custom_call.1} parent=31 // pred_check_branch
          %759 = sbr.rel (%p757) target = $region40
        $region39: #{tpu_custom_call.1} parent=31 // pred_region
          %s761 = ssub.s32 384, 384
          %762 = vsyncadd %s753, %s761
          %s763 = smul.addr %s20, 3
          %s764 = smul.addr %s763, 128
          %s765 = scalar_lea.hbm %s3, %s764
          %s767 = sshll.u32 %s756, 4
          %s768 = int_to_ptr.vmem [resolvable:$true] %s767
          %770 = dma.vmem_to_hbm [thread:$0]  %s768, 384, %s765, %s753
        $region40: #{tpu_custom_call.1} parent=31 // pred_fallthru
          _
      $region32: #{tpu_custom_call.1} parent=5 // pred_fallthru
        _
      %p771 = scmp.le.s32.totalorder 2, %s15
      // Predicated region
      $region41: #{tpu_custom_call.1} parent=5 // pred_check
        %p772 = pneg %p771
      $region42: #{tpu_custom_call.1} parent=5 // pred_check_branch
        %774 = sbr.rel (%p772) target = $region44
      $region43: #{tpu_custom_call.1} parent=5 // pred_region
        %s775 = ssub.s32 %s15, 2
        // Predicated region
        $region45: #{tpu_custom_call.1} parent=43 // pred_check
          %p776 = pneg %p112
        $region46: #{tpu_custom_call.1} parent=43 // pred_check_branch
          %778 = sbr.rel (%p776) target = $region48
        $region47: #{tpu_custom_call.1} parent=43 // pred_region
          %s779 = sand.u32 %s97, 1
          %s780 = scalar_lea.sflag [#allocation5], %s779
          %s781 = sand.u32 %s97, 1
          %s782 = smul.addr %s781, 24
          %s783 = scalar_lea.vmem [#allocation6], %s782
          %784 = dma.done %s780, 384
        $region48: #{tpu_custom_call.1} parent=43 // pred_fallthru
          _
      $region44: #{tpu_custom_call.1} parent=5 // pred_fallthru
        _
    $region6: #{tpu_custom_call.1} parent=1 // loop_footer
      %s19 = sadd.s32 1, %s15
    $region7: #{tpu_custom_call.1} parent=1 // loop_footer_branch
      %14 = sbr.rel target = $region3
    $region8: #{tpu_custom_call.1} parent=1 // loop_exit
      _
    %785 = vsyncpa [#allocation4], 1
    %s786 = scalar_lea.sflag [#allocation4], 1
    %787 = vsyncpa %s786, 1
    %788 = vsyncpa [#allocation5], 1
    %s789 = scalar_lea.sflag [#allocation5], 1
    %790 = vsyncpa %s789, 1

</llo_original>
